<compile_context>
chip_gen: v7x
topology: tpu7x:2x2x1
jax: 0.10.0
libtpu: 0.0.40
codegen_flags: <defaults>
</compile_context>

<pallas_src>
import functools

import jax
import jax.numpy as jnp
from jax.experimental import pallas as pl
from jax.experimental.pallas import tpu as pltpu

IN_DIM = 9
IN_PAD = 16          # input features padded 9 -> 16 (aligned bf16 LHS depth)
HIDDEN = 64
N_HIDDEN_LAYERS = 3
PI_DIM = 9
HEAD_DIM = PI_DIM + 1   # 9 policy logits + 1 value logit (fused head)
HEAD_PAD = 16           # fused head padded 10 -> 16 rows (was 64)

MAX_TILE_B = 16384      # VMEM-safe everywhere, incl. v7x (64 MiB phys / 32 MiB scoped)


def _round_up(n, m):
    return ((n + m - 1) // m) * m


def _policy_kernel(x_ref, w_in_ref, w_h_ref, w_head_ref, b_hid_ref, b_head_ref,
                   p_ref, v_ref):
    """Transposed layout: x_ref (16, TB); weights stored as W^T; outputs (9, TB) / (1, TB)."""
    mm_dtype = w_in_ref.dtype  # f32 or bf16 (matmul operands only)

    # Input layer + ReLU (bias add / ReLU in f32).
    h = jnp.dot(w_in_ref[...], x_ref[...],
                preferred_element_type=jnp.float32) + b_hid_ref[0]
    h = jnp.maximum(h, 0.0)                                      # (64, TB) f32

    # 3 hidden layers, statically unrolled (distinct resident weight views).
    for l in range(N_HIDDEN_LAYERS):
        h = jnp.dot(w_h_ref[l], h.astype(mm_dtype),
                    preferred_element_type=jnp.float32) + b_hid_ref[l + 1]
        h = jnp.maximum(h, 0.0)

    # Fused policy+value head: one (16,64)@(64,TB) matmul.
    logits = jnp.dot(w_head_ref[...], h.astype(mm_dtype),
                     preferred_element_type=jnp.float32) + b_head_ref[...]   # (16, TB)

    # Softmax over the 9 policy rows — exact f32 normalization (sums to 1).
    pi_logits = logits[:PI_DIM]                                  # (9, TB)
    m = jnp.max(pi_logits, axis=0, keepdims=True)
    e = jnp.exp(pi_logits - m)
    s = jnp.sum(e, axis=0, keepdims=True)
    p_ref[...] = (e / s).astype(p_ref.dtype)

    # Value head: tanh of row 9.
    v_ref[...] = jnp.tanh(logits[PI_DIM:PI_DIM + 1]).astype(v_ref.dtype)


def _pack_params(params, mm_dtype):
    """Pack 8 structured params into 5 kernel arrays (transposed, padded, head fused)."""
    w_in_t = jnp.pad(params["w_in"].T, ((0, 0), (0, IN_PAD - IN_DIM)))        # (64, 16)
    w_h_t = jnp.transpose(params["w_h"], (0, 2, 1))                           # (3, 64, 64)

    w_head_t = jnp.concatenate([params["w_pi"].T, params["w_v"].T], axis=0)   # (10, 64)
    w_head_t = jnp.pad(w_head_t, ((0, HEAD_PAD - HEAD_DIM), (0, 0)))          # (16, 64)

    b_hid = jnp.stack(
        [params["b_in"], params["b_h"][0], params["b_h"][1], params["b_h"][2]],
        axis=0)[:, :, None]                                                   # (4, 64, 1)
    b_head = jnp.pad(jnp.concatenate([params["b_pi"], params["b_v"]], axis=0),
                     (0, HEAD_PAD - HEAD_DIM))[:, None]                       # (16, 1)

    return (w_in_t.astype(mm_dtype), w_h_t.astype(mm_dtype),
            w_head_t.astype(mm_dtype),
            b_hid.astype(jnp.float32), b_head.astype(jnp.float32))


@functools.partial(jax.jit, static_argnames=("tile_b", "use_bf16"))
def tictactoe_policy_forward(x, params, *, tile_b=8192, use_bf16=True):
    """x: anything that flattens to (-1, 9) (e.g. (B, 3, 3) or (B, 9)). Returns (p, v)."""
    x = x.reshape(-1, IN_DIM).astype(jnp.float32)
    B = x.shape[0]

    # Batch tile: multiple of 128 lanes, VMEM-capped, no bigger than the padded batch,
    # and small enough that batches >= 256 give >= 2 grid steps (v7x megacore split).
    tile = _round_up(max(int(tile_b), 1), 128)
    tile = min(tile, MAX_TILE_B)
    b128 = _round_up(B, 128)
    tile = min(tile, b128)
    if b128 >= 256:
        half = _round_up(-(-b128 // 2), 128)
        tile = min(tile, half)
    Bp = _round_up(B, tile)

    mm_dtype = jnp.bfloat16 if use_bf16 else jnp.float32

    # Layout plumbing in the wrapper: pad batch + feature dims, transpose to (16, Bp).
    x_p = jnp.pad(x, ((0, Bp - B), (0, IN_PAD - IN_DIM)))
    x_t = x_p.T.astype(mm_dtype)

    w_in_t, w_h_t, w_head_t, b_hid, b_head = _pack_params(params, mm_dtype)

    grid = (Bp // tile,)
    p_t, v_t = pl.pallas_call(
        _policy_kernel,
        out_shape=(
            jax.ShapeDtypeStruct((PI_DIM, Bp), jnp.float32),
            jax.ShapeDtypeStruct((1, Bp), jnp.float32),
        ),
        grid=grid,
        in_specs=[
            pl.BlockSpec((IN_PAD, tile), lambda i: (0, i)),                           # x tile
            pl.BlockSpec((HIDDEN, IN_PAD), lambda i: (0, 0)),                         # resident
            pl.BlockSpec((N_HIDDEN_LAYERS, HIDDEN, HIDDEN), lambda i: (0, 0, 0)),     # resident
            pl.BlockSpec((HEAD_PAD, HIDDEN), lambda i: (0, 0)),                       # resident
            pl.BlockSpec((N_HIDDEN_LAYERS + 1, HIDDEN, 1), lambda i: (0, 0, 0)),      # resident
            pl.BlockSpec((HEAD_PAD, 1), lambda i: (0, 0)),                            # resident
        ],
        out_specs=(
            pl.BlockSpec((PI_DIM, tile), lambda i: (0, i)),
            pl.BlockSpec((1, tile), lambda i: (0, i)),
        ),
        compiler_params=pltpu.CompilerParams(
            dimension_semantics=("parallel",),
            vmem_limit_bytes=32 * 1024 * 1024,
        ),
    )(x_t, w_in_t, w_h_t, w_head_t, b_hid, b_head)

    p = p_t.T[:B]  # (B, 9)
    v = v_t.T[:B]  # (B, 1)
    return p, v


def init_params(key):
    """Deterministic init mirroring nn.Linear default U(-1/sqrt(fan_in), 1/sqrt(fan_in)).
    Weights stored as (in_features, out_features) = transpose of PyTorch layout."""
    ks = jax.random.split(key, 12)

    def lin(kw, kb, fan_in, fan_out):
        bound = 1.0 / jnp.sqrt(jnp.float32(fan_in))
        w = jax.random.uniform(kw, (fan_in, fan_out), jnp.float32, -bound, bound)
        b = jax.random.uniform(kb, (fan_out,), jnp.float32, -bound, bound)
        return w, b

    w_in, b_in = lin(ks[0], ks[1], IN_DIM, HIDDEN)
    w_h, b_h = [], []
    for l in range(N_HIDDEN_LAYERS):
        w, b = lin(ks[2 + 2 * l], ks[3 + 2 * l], HIDDEN, HIDDEN)
        w_h.append(w)
        b_h.append(b)
    w_pi, b_pi = lin(ks[8], ks[9], HIDDEN, PI_DIM)
    w_v, b_v = lin(ks[10], ks[11], HIDDEN, 1)

    return {
        "w_in": w_in, "b_in": b_in,
        "w_h": jnp.stack(w_h), "b_h": jnp.stack(b_h),
        "w_pi": w_pi, "b_pi": b_pi,
        "w_v": w_v, "b_v": b_v,
    }


def _reference_forward(x, params):
    """Pure-JAX reference (HIGHEST matmul precision for a trustworthy baseline)."""
    hp = jax.lax.Precision.HIGHEST
    x = x.reshape(-1, IN_DIM).astype(jnp.float32)
    h = jax.nn.relu(jnp.dot(x, params["w_in"], precision=hp) + params["b_in"])
    for l in range(N_HIDDEN_LAYERS):
        h = jax.nn.relu(jnp.dot(h, params["w_h"][l], precision=hp) + params["b_h"][l])
    p = jax.nn.softmax(jnp.dot(h, params["w_pi"], precision=hp) + params["b_pi"], axis=-1)
    v = jnp.tanh(jnp.dot(h, params["w_v"], precision=hp) + params["b_v"])
    return p, v


# TODO(synk): only forward() is implemented; play()/update() (optimizer + backward) are host-side
# training utilities with no single-kernel Pallas equivalent here.

if __name__ == "__main__":
    key = jax.random.PRNGKey(0)
    k_param, k_x = jax.random.split(key)
    params = init_params(k_param)

    # Small deterministic batch of boards, shaped (8, 3, 3).
    B = 8
    x = jax.random.uniform(k_x, (B, 3, 3), jnp.float32, -1.0, 1.0)
    p_ref, v_ref = _reference_forward(x, params)

    # Default path: bf16 MXU operands (f32 bias/ReLU/softmax/tanh) — looser tolerance.
    p, v = tictactoe_policy_forward(x, params)
    p = jax.block_until_ready(p)
    v = jax.block_until_ready(v)
    assert p.shape == (B, PI_DIM) and v.shape == (B, 1)
    assert jnp.allclose(p, p_ref, atol=3e-2)
    assert jnp.allclose(v, v_ref, atol=3e-2)
    assert jnp.allclose(jnp.sum(p, axis=-1), 1.0, atol=1e-3)

    # f32-operand path — tight tolerance against the reference.
    p32, v32 = tictactoe_policy_forward(x, params, use_bf16=False)
    p32 = jax.block_until_ready(p32)
    v32 = jax.block_until_ready(v32)
    assert jnp.allclose(p32, p_ref, atol=2e-3, rtol=2e-3)
    assert jnp.allclose(v32, v_ref, atol=2e-3, rtol=2e-3)
    assert jnp.allclose(jnp.sum(p32, axis=-1), 1.0, atol=1e-3)

    # Larger batch (not a multiple of the tile) exercises the batch grid + padding path
    # and the ">= 2 grid steps" rule for v7x.
    B2 = 300
    x2 = jax.random.uniform(jax.random.PRNGKey(1), (B2, IN_DIM), jnp.float32, -1.0, 1.0)
    p2_ref, v2_ref = _reference_forward(x2, params)
    p2, v2 = tictactoe_policy_forward(x2, params, tile_b=128)
    p2 = jax.block_until_ready(p2)
    v2 = jax.block_until_ready(v2)
    assert p2.shape == (B2, PI_DIM) and v2.shape == (B2, 1)
    assert jnp.allclose(p2, p2_ref, atol=3e-2)
    assert jnp.allclose(v2, v2_ref, atol=3e-2)
    assert jnp.allclose(jnp.sum(p2, axis=-1), 1.0, atol=1e-3)

    # Same larger batch with the default (large) tile — grid auto-splits to 2 tiles.
    p3, v3 = tictactoe_policy_forward(x2, params)
    p3 = jax.block_until_ready(p3)
    v3 = jax.block_until_ready(v3)
    assert jnp.allclose(p3, p2_ref, atol=3e-2)
    assert jnp.allclose(v3, v2_ref, atol=3e-2)

    print("KERNEL_OK")
</pallas_src>

<mosaic_0001>
module attributes {stable_mosaic.version = 11 : i64} {
  func.func @_policy_kernel(%arg0: i32, %arg1: memref<16x128xbf16, #tpu.memory_space<vmem>>, %arg2: memref<64x16xbf16, #tpu.memory_space<vmem>>, %arg3: memref<3x64x64xbf16, #tpu.memory_space<vmem>>, %arg4: memref<16x64xbf16, #tpu.memory_space<vmem>>, %arg5: memref<4x64x1xf32, #tpu.memory_space<vmem>>, %arg6: memref<16x1xf32, #tpu.memory_space<vmem>>, %arg7: memref<9x128xf32, #tpu.memory_space<vmem>>, %arg8: memref<1x128xf32, #tpu.memory_space<vmem>>) attributes {dimension_semantics = [#tpu.dimension_semantics<parallel>], iteration_bounds = array<i64: 1>, scalar_prefetch = 0 : i64, scratch_operands = 0 : i64, tpu.core_type = #tpu.core_type<tc>, window_params = [{transform_indices = @transform_0, window_bounds = array<i64: 16, 128>}, {pipeline_mode = #tpu.pipeline_mode<synchronous>, transform_indices = @transform_1, window_bounds = array<i64: 64, 16>}, {pipeline_mode = #tpu.pipeline_mode<synchronous>, transform_indices = @transform_2, window_bounds = array<i64: 3, 64, 64>}, {pipeline_mode = #tpu.pipeline_mode<synchronous>, transform_indices = @transform_3, window_bounds = array<i64: 16, 64>}, {pipeline_mode = #tpu.pipeline_mode<synchronous>, transform_indices = @transform_4, window_bounds = array<i64: 4, 64, 1>}, {pipeline_mode = #tpu.pipeline_mode<synchronous>, transform_indices = @transform_5, window_bounds = array<i64: 16, 1>}, {transform_indices = @transform_6, window_bounds = array<i64: 9, 128>}, {transform_indices = @transform_7, window_bounds = array<i64: 1, 128>}]} {
    %c0 = arith.constant 0 : index
    %c0_0 = arith.constant 0 : index
    %0 = vector.load %arg2[%c0, %c0_0] : memref<64x16xbf16, #tpu.memory_space<vmem>>, vector<64x16xbf16>
    %c0_1 = arith.constant 0 : index
    %c0_2 = arith.constant 0 : index
    %1 = vector.load %arg1[%c0_1, %c0_2] : memref<16x128xbf16, #tpu.memory_space<vmem>>, vector<16x128xbf16>
    %cst = arith.constant dense<0.000000e+00> : vector<64x128xf32>
    %2 = tpu.matmul %0, %1, %cst {dimension_numbers = #tpu.dot_dimension_numbers<[1], [0], [0], [1], [0, 0, 1, 1], [], []>} : vector<64x16xbf16>, vector<16x128xbf16>, vector<64x128xf32> -> vector<64x128xf32>
    %c0_3 = arith.constant 0 : index
    %c0_4 = arith.constant 0 : index
    %c0_5 = arith.constant 0 : index
    %3 = vector.load %arg5[%c0_3, %c0_4, %c0_5] : memref<4x64x1xf32, #tpu.memory_space<vmem>>, vector<1x64x1xf32>
    %4 = vector.shape_cast %3 : vector<1x64x1xf32> to vector<64x1xf32>
    %5 = vector.broadcast %4 : vector<64x1xf32> to vector<64x128xf32>
    %6 = arith.addf %2, %5 : vector<64x128xf32>
    %cst_6 = arith.constant 0.000000e+00 : f32
    %7 = vector.broadcast %cst_6 : f32 to vector<64x128xf32>
    %8 = arith.maximumf %6, %7 : vector<64x128xf32>
    %c0_7 = arith.constant 0 : index
    %c0_8 = arith.constant 0 : index
    %c0_9 = arith.constant 0 : index
    %9 = vector.load %arg3[%c0_7, %c0_8, %c0_9] : memref<3x64x64xbf16, #tpu.memory_space<vmem>>, vector<1x64x64xbf16>
    %10 = vector.shape_cast %9 : vector<1x64x64xbf16> to vector<64x64xbf16>
    %11 = arith.truncf %8 : vector<64x128xf32> to vector<64x128xbf16>
    %cst_10 = arith.constant dense<0.000000e+00> : vector<64x128xf32>
    %12 = tpu.matmul %10, %11, %cst_10 {dimension_numbers = #tpu.dot_dimension_numbers<[1], [0], [0], [1], [0, 0, 1, 1], [], []>} : vector<64x64xbf16>, vector<64x128xbf16>, vector<64x128xf32> -> vector<64x128xf32>
    %c1 = arith.constant 1 : index
    %c0_11 = arith.constant 0 : index
    %c0_12 = arith.constant 0 : index
    %13 = vector.load %arg5[%c1, %c0_11, %c0_12] : memref<4x64x1xf32, #tpu.memory_space<vmem>>, vector<1x64x1xf32>
    %14 = vector.shape_cast %13 : vector<1x64x1xf32> to vector<64x1xf32>
    %15 = vector.broadcast %14 : vector<64x1xf32> to vector<64x128xf32>
    %16 = arith.addf %12, %15 : vector<64x128xf32>
    %cst_13 = arith.constant 0.000000e+00 : f32
    %17 = vector.broadcast %cst_13 : f32 to vector<64x128xf32>
    %18 = arith.maximumf %16, %17 : vector<64x128xf32>
    %c1_14 = arith.constant 1 : index
    %c0_15 = arith.constant 0 : index
    %c0_16 = arith.constant 0 : index
    %19 = vector.load %arg3[%c1_14, %c0_15, %c0_16] : memref<3x64x64xbf16, #tpu.memory_space<vmem>>, vector<1x64x64xbf16>
    %20 = vector.shape_cast %19 : vector<1x64x64xbf16> to vector<64x64xbf16>
    %21 = arith.truncf %18 : vector<64x128xf32> to vector<64x128xbf16>
    %cst_17 = arith.constant dense<0.000000e+00> : vector<64x128xf32>
    %22 = tpu.matmul %20, %21, %cst_17 {dimension_numbers = #tpu.dot_dimension_numbers<[1], [0], [0], [1], [0, 0, 1, 1], [], []>} : vector<64x64xbf16>, vector<64x128xbf16>, vector<64x128xf32> -> vector<64x128xf32>
    %c2 = arith.constant 2 : index
    %c0_18 = arith.constant 0 : index
    %c0_19 = arith.constant 0 : index
    %23 = vector.load %arg5[%c2, %c0_18, %c0_19] : memref<4x64x1xf32, #tpu.memory_space<vmem>>, vector<1x64x1xf32>
    %24 = vector.shape_cast %23 : vector<1x64x1xf32> to vector<64x1xf32>
    %25 = vector.broadcast %24 : vector<64x1xf32> to vector<64x128xf32>
    %26 = arith.addf %22, %25 : vector<64x128xf32>
    %cst_20 = arith.constant 0.000000e+00 : f32
    %27 = vector.broadcast %cst_20 : f32 to vector<64x128xf32>
    %28 = arith.maximumf %26, %27 : vector<64x128xf32>
    %c2_21 = arith.constant 2 : index
    %c0_22 = arith.constant 0 : index
    %c0_23 = arith.constant 0 : index
    %29 = vector.load %arg3[%c2_21, %c0_22, %c0_23] : memref<3x64x64xbf16, #tpu.memory_space<vmem>>, vector<1x64x64xbf16>
    %30 = vector.shape_cast %29 : vector<1x64x64xbf16> to vector<64x64xbf16>
    %31 = arith.truncf %28 : vector<64x128xf32> to vector<64x128xbf16>
    %cst_24 = arith.constant dense<0.000000e+00> : vector<64x128xf32>
    %32 = tpu.matmul %30, %31, %cst_24 {dimension_numbers = #tpu.dot_dimension_numbers<[1], [0], [0], [1], [0, 0, 1, 1], [], []>} : vector<64x64xbf16>, vector<64x128xbf16>, vector<64x128xf32> -> vector<64x128xf32>
    %c3 = arith.constant 3 : index
    %c0_25 = arith.constant 0 : index
    %c0_26 = arith.constant 0 : index
    %33 = vector.load %arg5[%c3, %c0_25, %c0_26] : memref<4x64x1xf32, #tpu.memory_space<vmem>>, vector<1x64x1xf32>
    %34 = vector.shape_cast %33 : vector<1x64x1xf32> to vector<64x1xf32>
    %35 = vector.broadcast %34 : vector<64x1xf32> to vector<64x128xf32>
    %36 = arith.addf %32, %35 : vector<64x128xf32>
    %cst_27 = arith.constant 0.000000e+00 : f32
    %37 = vector.broadcast %cst_27 : f32 to vector<64x128xf32>
    %38 = arith.maximumf %36, %37 : vector<64x128xf32>
    %c0_28 = arith.constant 0 : index
    %c0_29 = arith.constant 0 : index
    %39 = vector.load %arg4[%c0_28, %c0_29] : memref<16x64xbf16, #tpu.memory_space<vmem>>, vector<16x64xbf16>
    %40 = arith.truncf %38 : vector<64x128xf32> to vector<64x128xbf16>
    %cst_30 = arith.constant dense<0.000000e+00> : vector<16x128xf32>
    %41 = tpu.matmul %39, %40, %cst_30 {dimension_numbers = #tpu.dot_dimension_numbers<[1], [0], [0], [1], [0, 0, 1, 1], [], []>} : vector<16x64xbf16>, vector<64x128xbf16>, vector<16x128xf32> -> vector<16x128xf32>
    %c0_31 = arith.constant 0 : index
    %c0_32 = arith.constant 0 : index
    %42 = vector.load %arg6[%c0_31, %c0_32] : memref<16x1xf32, #tpu.memory_space<vmem>>, vector<16x1xf32>
    %43 = vector.broadcast %42 : vector<16x1xf32> to vector<16x128xf32>
    %44 = arith.addf %41, %43 : vector<16x128xf32>
    %45 = vector.extract_strided_slice %44 {offsets = [0, 0], sizes = [9, 128], strides = [1, 1]} : vector<16x128xf32> to vector<9x128xf32>
    %cst_33 = arith.constant dense<0xFF800000> : vector<128xf32>
    %46 = vector.multi_reduction <maximumf>, %45, %cst_33 [0] : vector<9x128xf32> to vector<128xf32>
    %47 = vector.shape_cast %46 : vector<128xf32> to vector<1x128xf32>
    %48 = vector.broadcast %47 : vector<1x128xf32> to vector<9x128xf32>
    %49 = arith.subf %45, %48 : vector<9x128xf32>
    %50 = math.exp %49 : vector<9x128xf32>
    %cst_34 = arith.constant dense<0.000000e+00> : vector<128xf32>
    %51 = vector.multi_reduction <add>, %50, %cst_34 [0] : vector<9x128xf32> to vector<128xf32>
    %52 = vector.shape_cast %51 : vector<128xf32> to vector<1x128xf32>
    %53 = vector.broadcast %52 : vector<1x128xf32> to vector<9x128xf32>
    %54 = arith.divf %50, %53 : vector<9x128xf32>
    %c0_35 = arith.constant 0 : index
    %c0_36 = arith.constant 0 : index
    %55 = vector.load %arg7[%c0_35, %c0_36] : memref<9x128xf32, #tpu.memory_space<vmem>>, vector<9x128xf32>
    tpu.vector_store %arg7[%c0_35, %c0_36], %54 {strides = array<i32>} : memref<9x128xf32, #tpu.memory_space<vmem>>, vector<9x128xf32>,
    %56 = vector.extract_strided_slice %44 {offsets = [9, 0], sizes = [1, 128], strides = [1, 1]} : vector<16x128xf32> to vector<1x128xf32>
    %57 = math.tanh %56 : vector<1x128xf32>
    %c0_37 = arith.constant 0 : index
    %c0_38 = arith.constant 0 : index
    %58 = vector.load %arg8[%c0_37, %c0_38] : memref<1x128xf32, #tpu.memory_space<vmem>>, vector<1x128xf32>
    tpu.vector_store %arg8[%c0_37, %c0_38], %57 {strides = array<i32>} : memref<1x128xf32, #tpu.memory_space<vmem>>, vector<1x128xf32>,
    return
  }
  func.func @transform_0(%arg0: i32) -> (i32, i32) {
    %c0_i32 = arith.constant 0 : i32
    %c0_i32_0 = arith.constant 0 : i32
    return %c0_i32, %arg0 : i32, i32
  }
  func.func @transform_1(%arg0: i32) -> (i32, i32) {
    %c0_i32 = arith.constant 0 : i32
    %c0_i32_0 = arith.constant 0 : i32
    %c0_i32_1 = arith.constant 0 : i32
    return %c0_i32, %c0_i32_0 : i32, i32
  }
  func.func @transform_2(%arg0: i32) -> (i32, i32, i32) {
    %c0_i32 = arith.constant 0 : i32
    %c0_i32_0 = arith.constant 0 : i32
    %c0_i32_1 = arith.constant 0 : i32
    %c0_i32_2 = arith.constant 0 : i32
    return %c0_i32, %c0_i32_0, %c0_i32_1 : i32, i32, i32
  }
  func.func @transform_3(%arg0: i32) -> (i32, i32) {
    %c0_i32 = arith.constant 0 : i32
    %c0_i32_0 = arith.constant 0 : i32
    %c0_i32_1 = arith.constant 0 : i32
    return %c0_i32, %c0_i32_0 : i32, i32
  }
  func.func @transform_4(%arg0: i32) -> (i32, i32, i32) {
    %c0_i32 = arith.constant 0 : i32
    %c0_i32_0 = arith.constant 0 : i32
    %c0_i32_1 = arith.constant 0 : i32
    %c0_i32_2 = arith.constant 0 : i32
    return %c0_i32, %c0_i32_0, %c0_i32_1 : i32, i32, i32
  }
  func.func @transform_5(%arg0: i32) -> (i32, i32) {
    %c0_i32 = arith.constant 0 : i32
    %c0_i32_0 = arith.constant 0 : i32
    %c0_i32_1 = arith.constant 0 : i32
    return %c0_i32, %c0_i32_0 : i32, i32
  }
  func.func @transform_6(%arg0: i32) -> (i32, i32) {
    %c0_i32 = arith.constant 0 : i32
    %c0_i32_0 = arith.constant 0 : i32
    return %c0_i32, %arg0 : i32, i32
  }
  func.func @transform_7(%arg0: i32) -> (i32, i32) {
    %c0_i32 = arith.constant 0 : i32
    %c0_i32_0 = arith.constant 0 : i32
    return %c0_i32, %arg0 : i32, i32
  }
}

</mosaic_0001>

<llo_original>
// kernel: tictactoe_policy_forward.1
$region0: #{tictactoe_policy_forward.1}
  #allocation0 [shape = 'u32[]', space=smem, size = 0x4, offset = 0x4, fixed_abs, tag = 'smem constant byte address 0x4 - core index']
  #allocation1 [shape = 'u32[144,128]{1,0:T(1,128)}', space=vmem, size = 0x12000, scoped, tag = 'internal scratch']
  %s0 = inlined_call_operand.vmem [shape: bf16[16,128], index: 0, kind: input, shape index: {}]
  %s1 = inlined_call_operand.vmem [shape: bf16[64,16], index: 1, kind: input, shape index: {}]
  %s2 = inlined_call_operand.vmem [shape: bf16[3,64,64], index: 2, kind: input, shape index: {}]
  %s3 = inlined_call_operand.vmem [shape: bf16[16,64], index: 3, kind: input, shape index: {}]
  %s4 = inlined_call_operand.vmem [shape: f32[4,64,1], index: 4, kind: input, shape index: {}]
  %s5 = inlined_call_operand.vmem [shape: f32[16,1], index: 5, kind: input, shape index: {}]
  %s6 = inlined_call_operand.vmem [shape: f32[9,128], index: 6, kind: output, shape index: {0}]
  %s7 = inlined_call_operand.vmem [shape: f32[1,128], index: 7, kind: output, shape index: {1}]
  %8 = xla_tuple %s6, %s7
  %s9 = sld [smem:[#allocation0]]
  $region42: #{tictactoe_policy_forward.1} parent=0
    _
  %s11 = ssub.s32 1, %s9
  %s12 = scalar_select 0, %s11, %s9
  // Predicated region
  $region2: #{tictactoe_policy_forward.1} parent=0 // pred_check
    _
  $region3: #{tictactoe_policy_forward.1} parent=0 // pred_check_branch
    %14 = sbr.rel (0) target = $region5
  $region4: #{tictactoe_policy_forward.1} parent=0 // pred_region
    _
  $region5: #{tictactoe_policy_forward.1} parent=0 // pred_fallthru
    _
  // Predicated region
  $region6: #{tictactoe_policy_forward.1} parent=0 // pred_check
    _
  $region7: #{tictactoe_policy_forward.1} parent=0 // pred_check_branch
    %16 = sbr.rel (0) target = $region9
  $region8: #{tictactoe_policy_forward.1} parent=0 // pred_region
    _
  $region9: #{tictactoe_policy_forward.1} parent=0 // pred_fallthru
    _
  // Predicated region
  $region10: #{tictactoe_policy_forward.1} parent=0 // pred_check
    _
  $region11: #{tictactoe_policy_forward.1} parent=0 // pred_check_branch
    %18 = sbr.rel (0) target = $region13
  $region12: #{tictactoe_policy_forward.1} parent=0 // pred_region
    _
  $region13: #{tictactoe_policy_forward.1} parent=0 // pred_fallthru
    _
  // Predicated region
  $region14: #{tictactoe_policy_forward.1} parent=0 // pred_check
    _
  $region15: #{tictactoe_policy_forward.1} parent=0 // pred_check_branch
    %20 = sbr.rel (0) target = $region17
  $region16: #{tictactoe_policy_forward.1} parent=0 // pred_region
    _
  $region17: #{tictactoe_policy_forward.1} parent=0 // pred_fallthru
    _
  // Predicated region
  $region18: #{tictactoe_policy_forward.1} parent=0 // pred_check
    _
  $region19: #{tictactoe_policy_forward.1} parent=0 // pred_check_branch
    %22 = sbr.rel (0) target = $region21
  $region20: #{tictactoe_policy_forward.1} parent=0 // pred_region
    _
  $region21: #{tictactoe_policy_forward.1} parent=0 // pred_fallthru
    _
  // Predicated region
  $region22: #{tictactoe_policy_forward.1} parent=0 // pred_check
    _
  $region23: #{tictactoe_policy_forward.1} parent=0 // pred_check_branch
    %24 = sbr.rel (0) target = $region25
  $region24: #{tictactoe_policy_forward.1} parent=0 // pred_region
    _
  $region25: #{tictactoe_policy_forward.1} parent=0 // pred_fallthru
    _
  %v26 = vld [vmem:[%s1] sm:$0xf]
  %v27 = vld [vmem:[%s1 + $0x4] sm:$0xf]
  %v28 = vld [vmem:[%s1 + $0x8] sm:$0xf]
  %v29 = vld [vmem:[%s1 + $0xc] sm:$0xf]
  %v30 = vld [vmem:[%s1 + $0x10] sm:$0xf]
  %v31 = vld [vmem:[%s1 + $0x14] sm:$0xf]
  %v32 = vld [vmem:[%s1 + $0x18] sm:$0xf]
  %v33 = vld [vmem:[%s1 + $0x1c] sm:$0xf]
  %v34 = vld [vmem:[%s0] sm:$0xf]
  %v35 = vld [vmem:[%s0 + $0x4] sm:$0xf]
  %v36 = vld [vmem:[%s4] sm:$0xff]
  %v37 = vld [vmem:[%s4 + $0x8] sm:$0xff]
  %v38 = vld [vmem:[%s4 + $0x10] sm:$0xff]
  %v39 = vld [vmem:[%s4 + $0x18] sm:$0xff]
  %v40 = vld [vmem:[%s4 + $0x20] sm:$0xff]
  %v41 = vld [vmem:[%s4 + $0x28] sm:$0xff]
  %v42 = vld [vmem:[%s4 + $0x30] sm:$0xff]
  %v43 = vld [vmem:[%s4 + $0x38] sm:$0xff]
  %45 = vset.pattern.permute.xlu0 0
  %46 = vperm.xlu0 %45, %v36
  %v47 = vpop.permute.xlu0 %46
  %50 = vset.pattern.permute.xlu0 0
  %51 = vperm.xlu0 %50, %v37
  %v52 = vpop.permute.xlu0 %51
  %55 = vset.pattern.permute.xlu0 0
  %56 = vperm.xlu0 %55, %v38
  %v57 = vpop.permute.xlu0 %56
  %60 = vset.pattern.permute.xlu0 0
  %61 = vperm.xlu0 %60, %v39
  %v62 = vpop.permute.xlu0 %61
  %65 = vset.pattern.permute.xlu0 0
  %66 = vperm.xlu0 %65, %v40
  %v67 = vpop.permute.xlu0 %66
  %70 = vset.pattern.permute.xlu0 0
  %71 = vperm.xlu0 %70, %v41
  %v72 = vpop.permute.xlu0 %71
  %75 = vset.pattern.permute.xlu0 0
  %76 = vperm.xlu0 %75, %v42
  %v77 = vpop.permute.xlu0 %76
  %80 = vset.pattern.permute.xlu0 0
  %81 = vperm.xlu0 %80, %v43
  %v82 = vpop.permute.xlu0 %81
  %v92 = vunpack.c.l.b16 %v26
  %v93 = vunpack.c.l.b16 %v27
  %v94 = vunpack.c.l.b16 %v28
  %v95 = vunpack.c.l.b16 %v29
  %v96 = vunpack.c.l.b16 %v30
  %v97 = vunpack.c.l.b16 %v31
  %v98 = vunpack.c.l.b16 %v32
  %v99 = vunpack.c.l.b16 %v33
  %v100 = vpack.c.b16 %v93, %v92
  %v101 = vpack.c.b16 %v95, %v94
  %v102 = vpack.c.b16 %v97, %v96
  %v103 = vpack.c.b16 %v99, %v98
  %v106 = vunpack.c.l.b16 %v34
  %v107 = vunpack.c.l.b16 %v35
  %v108 = vpack.c.b16 %v107, %v106
  %vm110 = vcmask 130048
  %v112 = vsel %vm110, %v100, 0
  %v115 = vsel %vm110, %v101, 0
  %v118 = vsel %vm110, %v102, 0
  %v121 = vsel %vm110, %v103, 0
  %123 = vmatprep.subr.bf16.mxu0 0
  %124 = vmatpush1.bf16.msra.mxu0 %v108
  %125 = vmatprep.subr.bf16.mxu0 0
  %126 = vmatpush1.bf16.msra.mxu0 0
  %127 = vmatprep.subr.bf16.mxu0 0
  %128 = vmatpush1.bf16.msra.mxu0 0
  %129 = vmatprep.subr.bf16.mxu0 0
  %130 = vmatpush1.bf16.msra.mxu0 0
  %131 = vmatprep.subr.bf16.mxu0 0
  %132 = vmatpush1.bf16.msra.mxu0 0
  %133 = vmatprep.subr.bf16.mxu0 0
  %134 = vmatpush1.bf16.msra.mxu0 0
  %135 = vmatprep.subr.bf16.mxu0 0
  %136 = vmatpush1.bf16.msra.mxu0 0
  %137 = vmatprep.subr.bf16.mxu0 0
  %138 = vmatpush1.bf16.msra.mxu0 0
  %139 = vmatprep.subr.bf16.mxu0 0
  %140 = vmatpush1.bf16.msra.mxu0 0
  %141 = vmatprep.subr.bf16.mxu0 0
  %142 = vmatpush1.bf16.msra.mxu0 0
  %143 = vmatprep.subr.bf16.mxu0 0
  %144 = vmatpush1.bf16.msra.mxu0 0
  %145 = vmatprep.subr.bf16.mxu0 0
  %146 = vmatpush1.bf16.msra.mxu0 0
  %147 = vmatprep.subr.bf16.mxu0 0
  %148 = vmatpush1.bf16.msra.mxu0 0
  %149 = vmatprep.subr.bf16.mxu0 0
  %150 = vmatpush1.bf16.msra.mxu0 0
  %151 = vmatprep.subr.bf16.mxu0 0
  %152 = vmatpush1.bf16.msra.mxu0 0
  %153 = vmatprep.subr.bf16.mxu0 0
  %154 = vmatpush1.bf16.msra.mxu0 0
  %155 = vmatprep.mubr.bf16.mxu0 0
  %156 = vmatmul.mubr.bf16.gmra.mrb[0].mxu0 %v112
  %v157 = vpop.f32.mrb[0].mxu0
  %v158 = vadd.f32 %v47, %v157
  %v159 = vpop.f32.mrb[0].mxu0
  %v160 = vpop.f32.mrb[0].mxu0
  %v161 = vadd.f32 %v52, %v160
  %v162 = vpop.f32.mrb[0].mxu0
  %163 = vmatprep.mubr.bf16.mxu0 0
  %164 = vmatmul.mubr.bf16.gmra.mrb[0].mxu0 %v115
  %v165 = vpop.f32.mrb[0].mxu0
  %v166 = vadd.f32 %v57, %v165
  %v167 = vpop.f32.mrb[0].mxu0
  %v168 = vpop.f32.mrb[0].mxu0
  %v169 = vadd.f32 %v62, %v168
  %v170 = vpop.f32.mrb[0].mxu0
  %171 = vmatprep.mubr.bf16.mxu0 0
  %172 = vmatmul.mubr.bf16.gmra.mrb[0].mxu0 %v118
  %v173 = vpop.f32.mrb[0].mxu0
  %v174 = vadd.f32 %v67, %v173
  %v175 = vpop.f32.mrb[0].mxu0
  %v176 = vpop.f32.mrb[0].mxu0
  %v177 = vadd.f32 %v72, %v176
  %v178 = vpop.f32.mrb[0].mxu0
  %179 = vmatprep.mubr.bf16.mxu0 0
  %180 = vmatmul.mubr.bf16.gmra.mrb[0].mxu0 %v121
  %v181 = vpop.f32.mrb[0].mxu0
  %v182 = vadd.f32 %v77, %v181
  %v183 = vpop.f32.mrb[0].mxu0
  %v184 = vpop.f32.mrb[0].mxu0
  %v185 = vadd.f32 %v82, %v184
  %v186 = vpop.f32.mrb[0].mxu0
  %187 = vdwg.mxu0
  %v188 = vmax.f32 %v158, 0.0
  %v189 = vmax.f32 %v161, 0.0
  %v190 = vmax.f32 %v166, 0.0
  %v191 = vmax.f32 %v169, 0.0
  %v192 = vmax.f32 %v174, 0.0
  %v193 = vmax.f32 %v177, 0.0
  %v194 = vmax.f32 %v182, 0.0
  %v195 = vmax.f32 %v185, 0.0
  %v196 = vld [vmem:[%s2] sm:$0xf]
  %v197 = vld [vmem:[%s2 + $0x4] sm:$0xf]
  %v198 = vld [vmem:[%s2 + $0x8] sm:$0xf]
  %v199 = vld [vmem:[%s2 + $0xc] sm:$0xf]
  %v200 = vld [vmem:[%s2 + $0x10] sm:$0xf]
  %v201 = vld [vmem:[%s2 + $0x14] sm:$0xf]
  %v202 = vld [vmem:[%s2 + $0x18] sm:$0xf]
  %v203 = vld [vmem:[%s2 + $0x1c] sm:$0xf]
  %v204 = vpack.c.bf16 %v189, %v188
  %v205 = vpack.c.bf16 %v191, %v190
  %v206 = vpack.c.bf16 %v193, %v192
  %v207 = vpack.c.bf16 %v195, %v194
  %s208 = scalar_lea.vmem %s4, 64
  %v209 = vld [vmem:[%s208] sm:$0xff]
  %v210 = vld [vmem:[%s208 + $0x8] sm:$0xff]
  %v211 = vld [vmem:[%s208 + $0x10] sm:$0xff]
  %v212 = vld [vmem:[%s208 + $0x18] sm:$0xff]
  %v213 = vld [vmem:[%s208 + $0x20] sm:$0xff]
  %v214 = vld [vmem:[%s208 + $0x28] sm:$0xff]
  %v215 = vld [vmem:[%s208 + $0x30] sm:$0xff]
  %v216 = vld [vmem:[%s208 + $0x38] sm:$0xff]
  %218 = vset.pattern.permute.xlu0 0
  %219 = vperm.xlu0 %218, %v209
  %v220 = vpop.permute.xlu0 %219
  %223 = vset.pattern.permute.xlu0 0
  %224 = vperm.xlu0 %223, %v210
  %v225 = vpop.permute.xlu0 %224
  %228 = vset.pattern.permute.xlu0 0
  %229 = vperm.xlu0 %228, %v211
  %v230 = vpop.permute.xlu0 %229
  %233 = vset.pattern.permute.xlu0 0
  %234 = vperm.xlu0 %233, %v212
  %v235 = vpop.permute.xlu0 %234
  %238 = vset.pattern.permute.xlu0 0
  %239 = vperm.xlu0 %238, %v213
  %v240 = vpop.permute.xlu0 %239
  %243 = vset.pattern.permute.xlu0 0
  %244 = vperm.xlu0 %243, %v214
  %v245 = vpop.permute.xlu0 %244
  %248 = vset.pattern.permute.xlu0 0
  %249 = vperm.xlu0 %248, %v215
  %v250 = vpop.permute.xlu0 %249
  %253 = vset.pattern.permute.xlu0 0
  %254 = vperm.xlu0 %253, %v216
  %v255 = vpop.permute.xlu0 %254
  %v265 = vunpack.c.l.b16 %v196
  %v266 = vunpack.c.l.b16 %v197
  %v267 = vunpack.c.l.b16 %v198
  %v268 = vunpack.c.l.b16 %v199
  %v269 = vunpack.c.l.b16 %v200
  %v270 = vunpack.c.l.b16 %v201
  %v271 = vunpack.c.l.b16 %v202
  %v272 = vunpack.c.l.b16 %v203
  %v273 = vpack.c.b16 %v266, %v265
  %v274 = vpack.c.b16 %v268, %v267
  %v275 = vpack.c.b16 %v270, %v269
  %v276 = vpack.c.b16 %v272, %v271
  %vm277 = vcmask 523264
  %v279 = vsel %vm277, %v273, 0
  %v282 = vsel %vm277, %v274, 0
  %v285 = vsel %vm277, %v275, 0
  %v288 = vsel %vm277, %v276, 0
  %290 = vmatprep.subr.bf16.mxu0 0
  %291 = vmatpush1.bf16.msra.mxu0 %v204
  %292 = vmatprep.subr.bf16.mxu0 0
  %293 = vmatpush1.bf16.msra.mxu0 %v205
  %294 = vmatprep.subr.bf16.mxu0 0
  %295 = vmatpush1.bf16.msra.mxu0 %v206
  %296 = vmatprep.subr.bf16.mxu0 0
  %297 = vmatpush1.bf16.msra.mxu0 %v207
  %298 = vmatprep.subr.bf16.mxu0 0
  %299 = vmatpush1.bf16.msra.mxu0 0
  %300 = vmatprep.subr.bf16.mxu0 0
  %301 = vmatpush1.bf16.msra.mxu0 0
  %302 = vmatprep.subr.bf16.mxu0 0
  %303 = vmatpush1.bf16.msra.mxu0 0
  %304 = vmatprep.subr.bf16.mxu0 0
  %305 = vmatpush1.bf16.msra.mxu0 0
  %306 = vmatprep.subr.bf16.mxu0 0
  %307 = vmatpush1.bf16.msra.mxu0 0
  %308 = vmatprep.subr.bf16.mxu0 0
  %309 = vmatpush1.bf16.msra.mxu0 0
  %310 = vmatprep.subr.bf16.mxu0 0
  %311 = vmatpush1.bf16.msra.mxu0 0
  %312 = vmatprep.subr.bf16.mxu0 0
  %313 = vmatpush1.bf16.msra.mxu0 0
  %314 = vmatprep.subr.bf16.mxu0 0
  %315 = vmatpush1.bf16.msra.mxu0 0
  %316 = vmatprep.subr.bf16.mxu0 0
  %317 = vmatpush1.bf16.msra.mxu0 0
  %318 = vmatprep.subr.bf16.mxu0 0
  %319 = vmatpush1.bf16.msra.mxu0 0
  %320 = vmatprep.subr.bf16.mxu0 0
  %321 = vmatpush1.bf16.msra.mxu0 0
  %322 = vmatprep.mubr.bf16.mxu0 0
  %323 = vmatmul.mubr.bf16.gmra.mrb[0].mxu0 %v279
  %v324 = vpop.f32.mrb[0].mxu0
  %v325 = vadd.f32 %v220, %v324
  %v326 = vpop.f32.mrb[0].mxu0
  %v327 = vpop.f32.mrb[0].mxu0
  %v328 = vadd.f32 %v225, %v327
  %v329 = vpop.f32.mrb[0].mxu0
  %330 = vmatprep.mubr.bf16.mxu0 0
  %331 = vmatmul.mubr.bf16.gmra.mrb[0].mxu0 %v282
  %v332 = vpop.f32.mrb[0].mxu0
  %v333 = vadd.f32 %v230, %v332
  %v334 = vpop.f32.mrb[0].mxu0
  %v335 = vpop.f32.mrb[0].mxu0
  %v336 = vadd.f32 %v235, %v335
  %v337 = vpop.f32.mrb[0].mxu0
  %338 = vmatprep.mubr.bf16.mxu0 0
  %339 = vmatmul.mubr.bf16.gmra.mrb[0].mxu0 %v285
  %v340 = vpop.f32.mrb[0].mxu0
  %v341 = vadd.f32 %v240, %v340
  %v342 = vpop.f32.mrb[0].mxu0
  %v343 = vpop.f32.mrb[0].mxu0
  %v344 = vadd.f32 %v245, %v343
  %v345 = vpop.f32.mrb[0].mxu0
  %346 = vmatprep.mubr.bf16.mxu0 0
  %347 = vmatmul.mubr.bf16.gmra.mrb[0].mxu0 %v288
  %v348 = vpop.f32.mrb[0].mxu0
  %v349 = vadd.f32 %v250, %v348
  %v350 = vpop.f32.mrb[0].mxu0
  %v351 = vpop.f32.mrb[0].mxu0
  %v352 = vadd.f32 %v255, %v351
  %v353 = vpop.f32.mrb[0].mxu0
  %354 = vdwg.mxu0
  %v355 = vmax.f32 %v325, 0.0
  %v356 = vmax.f32 %v328, 0.0
  %v357 = vmax.f32 %v333, 0.0
  %v358 = vmax.f32 %v336, 0.0
  %v359 = vmax.f32 %v341, 0.0
  %v360 = vmax.f32 %v344, 0.0
  %v361 = vmax.f32 %v349, 0.0
  %v362 = vmax.f32 %v352, 0.0
  %s363 = scalar_lea.vmem %s2, 32
  %v364 = vld [vmem:[%s363] sm:$0xf]
  %v365 = vld [vmem:[%s363 + $0x4] sm:$0xf]
  %v366 = vld [vmem:[%s363 + $0x8] sm:$0xf]
  %v367 = vld [vmem:[%s363 + $0xc] sm:$0xf]
  %v368 = vld [vmem:[%s363 + $0x10] sm:$0xf]
  %v369 = vld [vmem:[%s363 + $0x14] sm:$0xf]
  %v370 = vld [vmem:[%s363 + $0x18] sm:$0xf]
  %v371 = vld [vmem:[%s363 + $0x1c] sm:$0xf]
  %v372 = vpack.c.bf16 %v356, %v355
  %v373 = vpack.c.bf16 %v358, %v357
  %v374 = vpack.c.bf16 %v360, %v359
  %v375 = vpack.c.bf16 %v362, %v361
  %s376 = scalar_lea.vmem %s4, 128
  %v377 = vld [vmem:[%s376] sm:$0xff]
  %v378 = vld [vmem:[%s376 + $0x8] sm:$0xff]
  %v379 = vld [vmem:[%s376 + $0x10] sm:$0xff]
  %v380 = vld [vmem:[%s376 + $0x18] sm:$0xff]
  %v381 = vld [vmem:[%s376 + $0x20] sm:$0xff]
  %v382 = vld [vmem:[%s376 + $0x28] sm:$0xff]
  %v383 = vld [vmem:[%s376 + $0x30] sm:$0xff]
  %v384 = vld [vmem:[%s376 + $0x38] sm:$0xff]
  %386 = vset.pattern.permute.xlu0 0
  %387 = vperm.xlu0 %386, %v377
  %v388 = vpop.permute.xlu0 %387
  %391 = vset.pattern.permute.xlu0 0
  %392 = vperm.xlu0 %391, %v378
  %v393 = vpop.permute.xlu0 %392
  %396 = vset.pattern.permute.xlu0 0
  %397 = vperm.xlu0 %396, %v379
  %v398 = vpop.permute.xlu0 %397
  %401 = vset.pattern.permute.xlu0 0
  %402 = vperm.xlu0 %401, %v380
  %v403 = vpop.permute.xlu0 %402
  %406 = vset.pattern.permute.xlu0 0
  %407 = vperm.xlu0 %406, %v381
  %v408 = vpop.permute.xlu0 %407
  %411 = vset.pattern.permute.xlu0 0
  %412 = vperm.xlu0 %411, %v382
  %v413 = vpop.permute.xlu0 %412
  %416 = vset.pattern.permute.xlu0 0
  %417 = vperm.xlu0 %416, %v383
  %v418 = vpop.permute.xlu0 %417
  %421 = vset.pattern.permute.xlu0 0
  %422 = vperm.xlu0 %421, %v384
  %v423 = vpop.permute.xlu0 %422
  %v433 = vunpack.c.l.b16 %v364
  %v434 = vunpack.c.l.b16 %v365
  %v435 = vunpack.c.l.b16 %v366
  %v436 = vunpack.c.l.b16 %v367
  %v437 = vunpack.c.l.b16 %v368
  %v438 = vunpack.c.l.b16 %v369
  %v439 = vunpack.c.l.b16 %v370
  %v440 = vunpack.c.l.b16 %v371
  %v441 = vpack.c.b16 %v434, %v433
  %v442 = vpack.c.b16 %v436, %v435
  %v443 = vpack.c.b16 %v438, %v437
  %v444 = vpack.c.b16 %v440, %v439
  %v446 = vsel %vm277, %v441, 0
  %v449 = vsel %vm277, %v442, 0
  %v452 = vsel %vm277, %v443, 0
  %v455 = vsel %vm277, %v444, 0
  %457 = vmatprep.subr.bf16.mxu0 0
  %458 = vmatpush1.bf16.msra.mxu0 %v372
  %459 = vmatprep.subr.bf16.mxu0 0
  %460 = vmatpush1.bf16.msra.mxu0 %v373
  %461 = vmatprep.subr.bf16.mxu0 0
  %462 = vmatpush1.bf16.msra.mxu0 %v374
  %463 = vmatprep.subr.bf16.mxu0 0
  %464 = vmatpush1.bf16.msra.mxu0 %v375
  %465 = vmatprep.subr.bf16.mxu0 0
  %466 = vmatpush1.bf16.msra.mxu0 0
  %467 = vmatprep.subr.bf16.mxu0 0
  %468 = vmatpush1.bf16.msra.mxu0 0
  %469 = vmatprep.subr.bf16.mxu0 0
  %470 = vmatpush1.bf16.msra.mxu0 0
  %471 = vmatprep.subr.bf16.mxu0 0
  %472 = vmatpush1.bf16.msra.mxu0 0
  %473 = vmatprep.subr.bf16.mxu0 0
  %474 = vmatpush1.bf16.msra.mxu0 0
  %475 = vmatprep.subr.bf16.mxu0 0
  %476 = vmatpush1.bf16.msra.mxu0 0
  %477 = vmatprep.subr.bf16.mxu0 0
  %478 = vmatpush1.bf16.msra.mxu0 0
  %479 = vmatprep.subr.bf16.mxu0 0
  %480 = vmatpush1.bf16.msra.mxu0 0
  %481 = vmatprep.subr.bf16.mxu0 0
  %482 = vmatpush1.bf16.msra.mxu0 0
  %483 = vmatprep.subr.bf16.mxu0 0
  %484 = vmatpush1.bf16.msra.mxu0 0
  %485 = vmatprep.subr.bf16.mxu0 0
  %486 = vmatpush1.bf16.msra.mxu0 0
  %487 = vmatprep.subr.bf16.mxu0 0
  %488 = vmatpush1.bf16.msra.mxu0 0
  %489 = vmatprep.mubr.bf16.mxu0 0
  %490 = vmatmul.mubr.bf16.gmra.mrb[0].mxu0 %v446
  %v491 = vpop.f32.mrb[0].mxu0
  %v492 = vadd.f32 %v388, %v491
  %v493 = vpop.f32.mrb[0].mxu0
  %v494 = vpop.f32.mrb[0].mxu0
  %v495 = vadd.f32 %v393, %v494
  %v496 = vpop.f32.mrb[0].mxu0
  %497 = vmatprep.mubr.bf16.mxu0 0
  %498 = vmatmul.mubr.bf16.gmra.mrb[0].mxu0 %v449
  %v499 = vpop.f32.mrb[0].mxu0
  %v500 = vadd.f32 %v398, %v499
  %v501 = vpop.f32.mrb[0].mxu0
  %v502 = vpop.f32.mrb[0].mxu0
  %v503 = vadd.f32 %v403, %v502
  %v504 = vpop.f32.mrb[0].mxu0
  %505 = vmatprep.mubr.bf16.mxu0 0
  %506 = vmatmul.mubr.bf16.gmra.mrb[0].mxu0 %v452
  %v507 = vpop.f32.mrb[0].mxu0
  %v508 = vadd.f32 %v408, %v507
  %v509 = vpop.f32.mrb[0].mxu0
  %v510 = vpop.f32.mrb[0].mxu0
  %v511 = vadd.f32 %v413, %v510
  %v512 = vpop.f32.mrb[0].mxu0
  %513 = vmatprep.mubr.bf16.mxu0 0
  %514 = vmatmul.mubr.bf16.gmra.mrb[0].mxu0 %v455
  %v515 = vpop.f32.mrb[0].mxu0
  %v516 = vadd.f32 %v418, %v515
  %v517 = vpop.f32.mrb[0].mxu0
  %v518 = vpop.f32.mrb[0].mxu0
  %v519 = vadd.f32 %v423, %v518
  %v520 = vpop.f32.mrb[0].mxu0
  %521 = vdwg.mxu0
  %v522 = vmax.f32 %v492, 0.0
  %v523 = vmax.f32 %v495, 0.0
  %v524 = vmax.f32 %v500, 0.0
  %v525 = vmax.f32 %v503, 0.0
  %v526 = vmax.f32 %v508, 0.0
  %v527 = vmax.f32 %v511, 0.0
  %v528 = vmax.f32 %v516, 0.0
  %v529 = vmax.f32 %v519, 0.0
  %s530 = scalar_lea.vmem %s2, 64
  %v531 = vld [vmem:[%s530] sm:$0xf]
  %v532 = vld [vmem:[%s530 + $0x4] sm:$0xf]
  %v533 = vld [vmem:[%s530 + $0x8] sm:$0xf]
  %v534 = vld [vmem:[%s530 + $0xc] sm:$0xf]
  %v535 = vld [vmem:[%s530 + $0x10] sm:$0xf]
  %v536 = vld [vmem:[%s530 + $0x14] sm:$0xf]
  %v537 = vld [vmem:[%s530 + $0x18] sm:$0xf]
  %v538 = vld [vmem:[%s530 + $0x1c] sm:$0xf]
  %v539 = vpack.c.bf16 %v523, %v522
  %v540 = vpack.c.bf16 %v525, %v524
  %v541 = vpack.c.bf16 %v527, %v526
  %v542 = vpack.c.bf16 %v529, %v528
  %s543 = scalar_lea.vmem %s4, 192
  %v544 = vld [vmem:[%s543] sm:$0xff]
  %v545 = vld [vmem:[%s543 + $0x8] sm:$0xff]
  %v546 = vld [vmem:[%s543 + $0x10] sm:$0xff]
  %v547 = vld [vmem:[%s543 + $0x18] sm:$0xff]
  %v548 = vld [vmem:[%s543 + $0x20] sm:$0xff]
  %v549 = vld [vmem:[%s543 + $0x28] sm:$0xff]
  %v550 = vld [vmem:[%s543 + $0x30] sm:$0xff]
  %v551 = vld [vmem:[%s543 + $0x38] sm:$0xff]
  %553 = vset.pattern.permute.xlu0 0
  %554 = vperm.xlu0 %553, %v544
  %v555 = vpop.permute.xlu0 %554
  %558 = vset.pattern.permute.xlu0 0
  %559 = vperm.xlu0 %558, %v545
  %v560 = vpop.permute.xlu0 %559
  %563 = vset.pattern.permute.xlu0 0
  %564 = vperm.xlu0 %563, %v546
  %v565 = vpop.permute.xlu0 %564
  %568 = vset.pattern.permute.xlu0 0
  %569 = vperm.xlu0 %568, %v547
  %v570 = vpop.permute.xlu0 %569
  %573 = vset.pattern.permute.xlu0 0
  %574 = vperm.xlu0 %573, %v548
  %v575 = vpop.permute.xlu0 %574
  %578 = vset.pattern.permute.xlu0 0
  %579 = vperm.xlu0 %578, %v549
  %v580 = vpop.permute.xlu0 %579
  %583 = vset.pattern.permute.xlu0 0
  %584 = vperm.xlu0 %583, %v550
  %v585 = vpop.permute.xlu0 %584
  %588 = vset.pattern.permute.xlu0 0
  %589 = vperm.xlu0 %588, %v551
  %v590 = vpop.permute.xlu0 %589
  %v600 = vunpack.c.l.b16 %v531
  %v601 = vunpack.c.l.b16 %v532
  %v602 = vunpack.c.l.b16 %v533
  %v603 = vunpack.c.l.b16 %v534
  %v604 = vunpack.c.l.b16 %v535
  %v605 = vunpack.c.l.b16 %v536
  %v606 = vunpack.c.l.b16 %v537
  %v607 = vunpack.c.l.b16 %v538
  %v608 = vpack.c.b16 %v601, %v600
  %v609 = vpack.c.b16 %v603, %v602
  %v610 = vpack.c.b16 %v605, %v604
  %v611 = vpack.c.b16 %v607, %v606
  %v613 = vsel %vm277, %v608, 0
  %v616 = vsel %vm277, %v609, 0
  %v619 = vsel %vm277, %v610, 0
  %v622 = vsel %vm277, %v611, 0
  %624 = vmatprep.subr.bf16.mxu0 0
  %625 = vmatpush1.bf16.msra.mxu0 %v539
  %626 = vmatprep.subr.bf16.mxu0 0
  %627 = vmatpush1.bf16.msra.mxu0 %v540
  %628 = vmatprep.subr.bf16.mxu0 0
  %629 = vmatpush1.bf16.msra.mxu0 %v541
  %630 = vmatprep.subr.bf16.mxu0 0
  %631 = vmatpush1.bf16.msra.mxu0 %v542
  %632 = vmatprep.subr.bf16.mxu0 0
  %633 = vmatpush1.bf16.msra.mxu0 0
  %634 = vmatprep.subr.bf16.mxu0 0
  %635 = vmatpush1.bf16.msra.mxu0 0
  %636 = vmatprep.subr.bf16.mxu0 0
  %637 = vmatpush1.bf16.msra.mxu0 0
  %638 = vmatprep.subr.bf16.mxu0 0
  %639 = vmatpush1.bf16.msra.mxu0 0
  %640 = vmatprep.subr.bf16.mxu0 0
  %641 = vmatpush1.bf16.msra.mxu0 0
  %642 = vmatprep.subr.bf16.mxu0 0
  %643 = vmatpush1.bf16.msra.mxu0 0
  %644 = vmatprep.subr.bf16.mxu0 0
  %645 = vmatpush1.bf16.msra.mxu0 0
  %646 = vmatprep.subr.bf16.mxu0 0
  %647 = vmatpush1.bf16.msra.mxu0 0
  %648 = vmatprep.subr.bf16.mxu0 0
  %649 = vmatpush1.bf16.msra.mxu0 0
  %650 = vmatprep.subr.bf16.mxu0 0
  %651 = vmatpush1.bf16.msra.mxu0 0
  %652 = vmatprep.subr.bf16.mxu0 0
  %653 = vmatpush1.bf16.msra.mxu0 0
  %654 = vmatprep.subr.bf16.mxu0 0
  %655 = vmatpush1.bf16.msra.mxu0 0
  %656 = vmatprep.mubr.bf16.mxu0 0
  %657 = vmatmul.mubr.bf16.gmra.mrb[0].mxu0 %v613
  %v658 = vpop.f32.mrb[0].mxu0
  %v659 = vadd.f32 %v555, %v658
  %v660 = vpop.f32.mrb[0].mxu0
  %v661 = vpop.f32.mrb[0].mxu0
  %v662 = vadd.f32 %v560, %v661
  %v663 = vpop.f32.mrb[0].mxu0
  %664 = vmatprep.mubr.bf16.mxu0 0
  %665 = vmatmul.mubr.bf16.gmra.mrb[0].mxu0 %v616
  %v666 = vpop.f32.mrb[0].mxu0
  %v667 = vadd.f32 %v565, %v666
  %v668 = vpop.f32.mrb[0].mxu0
  %v669 = vpop.f32.mrb[0].mxu0
  %v670 = vadd.f32 %v570, %v669
  %v671 = vpop.f32.mrb[0].mxu0
  %672 = vmatprep.mubr.bf16.mxu0 0
  %673 = vmatmul.mubr.bf16.gmra.mrb[0].mxu0 %v619
  %v674 = vpop.f32.mrb[0].mxu0
  %v675 = vadd.f32 %v575, %v674
  %v676 = vpop.f32.mrb[0].mxu0
  %v677 = vpop.f32.mrb[0].mxu0
  %v678 = vadd.f32 %v580, %v677
  %v679 = vpop.f32.mrb[0].mxu0
  %680 = vmatprep.mubr.bf16.mxu0 0
  %681 = vmatmul.mubr.bf16.gmra.mrb[0].mxu0 %v622
  %v682 = vpop.f32.mrb[0].mxu0
  %v683 = vadd.f32 %v585, %v682
  %v684 = vpop.f32.mrb[0].mxu0
  %v685 = vpop.f32.mrb[0].mxu0
  %v686 = vadd.f32 %v590, %v685
  %v687 = vpop.f32.mrb[0].mxu0
  %688 = vdwg.mxu0
  %v689 = vmax.f32 %v659, 0.0
  %v690 = vmax.f32 %v662, 0.0
  %v691 = vmax.f32 %v667, 0.0
  %v692 = vmax.f32 %v670, 0.0
  %v693 = vmax.f32 %v675, 0.0
  %v694 = vmax.f32 %v678, 0.0
  %v695 = vmax.f32 %v683, 0.0
  %v696 = vmax.f32 %v686, 0.0
  %v697 = vld [vmem:[%s3] sm:$0xf]
  %v698 = vld [vmem:[%s3 + $0x4] sm:$0xf]
  %v699 = vpack.c.bf16 %v690, %v689
  %v700 = vpack.c.bf16 %v692, %v691
  %v701 = vpack.c.bf16 %v694, %v693
  %v702 = vpack.c.bf16 %v696, %v695
  %v703 = vld [vmem:[%s5] sm:$0xff]
  %v704 = vld [vmem:[%s5 + $0x8] sm:$0xff]
  %706 = vset.pattern.permute.xlu0 0
  %707 = vperm.xlu0 %706, %v703
  %v708 = vpop.permute.xlu0 %707
  %711 = vset.pattern.permute.xlu0 0
  %712 = vperm.xlu0 %711, %v704
  %v713 = vpop.permute.xlu0 %712
  %v717 = vunpack.c.l.b16 %v697
  %v718 = vunpack.c.l.b16 %v698
  %v719 = vpack.c.b16 %v718, %v717
  %v721 = vsel %vm277, %v719, 0
  %723 = vmatprep.subr.bf16.mxu0 0
  %724 = vmatpush1.bf16.msra.mxu0 %v699
  %725 = vmatprep.subr.bf16.mxu0 0
  %726 = vmatpush1.bf16.msra.mxu0 %v700
  %727 = vmatprep.subr.bf16.mxu0 0
  %728 = vmatpush1.bf16.msra.mxu0 %v701
  %729 = vmatprep.subr.bf16.mxu0 0
  %730 = vmatpush1.bf16.msra.mxu0 %v702
  %731 = vmatprep.subr.bf16.mxu0 0
  %732 = vmatpush1.bf16.msra.mxu0 0
  %733 = vmatprep.subr.bf16.mxu0 0
  %734 = vmatpush1.bf16.msra.mxu0 0
  %735 = vmatprep.subr.bf16.mxu0 0
  %736 = vmatpush1.bf16.msra.mxu0 0
  %737 = vmatprep.subr.bf16.mxu0 0
  %738 = vmatpush1.bf16.msra.mxu0 0
  %739 = vmatprep.subr.bf16.mxu0 0
  %740 = vmatpush1.bf16.msra.mxu0 0
  %741 = vmatprep.subr.bf16.mxu0 0
  %742 = vmatpush1.bf16.msra.mxu0 0
  %743 = vmatprep.subr.bf16.mxu0 0
  %744 = vmatpush1.bf16.msra.mxu0 0
  %745 = vmatprep.subr.bf16.mxu0 0
  %746 = vmatpush1.bf16.msra.mxu0 0
  %747 = vmatprep.subr.bf16.mxu0 0
  %748 = vmatpush1.bf16.msra.mxu0 0
  %749 = vmatprep.subr.bf16.mxu0 0
  %750 = vmatpush1.bf16.msra.mxu0 0
  %751 = vmatprep.subr.bf16.mxu0 0
  %752 = vmatpush1.bf16.msra.mxu0 0
  %753 = vmatprep.subr.bf16.mxu0 0
  %754 = vmatpush1.bf16.msra.mxu0 0
  %755 = vmatprep.mubr.bf16.mxu0 0
  %756 = vmatmul.mubr.bf16.gmra.mrb[0].mxu0 %v721
  %v757 = vpop.f32.mrb[0].mxu0
  %v758 = vadd.f32 %v708, %v757
  %v759 = vpop.f32.mrb[0].mxu0
  %v760 = vpop.f32.mrb[0].mxu0
  %v761 = vadd.f32 %v713, %v760
  %v762 = vpop.f32.mrb[0].mxu0
  %763 = vdwg.mxu0
  %vm764 = vcmask 1040384
  %v765 = vsel %vm764, %v761, -inf
  %v766 = vmax.f32 %v758, %v765
  %v767 = vrot.slane %v766, 4
  %v768 = vmax.f32 %v766, %v767
  %v769 = vrot.slane %v768, 2
  %v770 = vmax.f32 %v768, %v769
  %v771 = vrot.slane %v770, 1
  %v772 = vmax.f32 %v770, %v771
  %v773 = vsub.f32 %v758, %v772
  %v774 = vsub.f32 %v761, %v772
  %v775 = vmul.f32 %v773, 1.442695
  %v776 = vpow.pop %v775
  %v777 = vmul.f32 %v774, 1.442695
  %v778 = vpow.pop %v777
  %v779 = vsel %vm764, %v778, 0.0
  %v780 = vadd.f32 %v776, %v779
  %v781 = vrot.slane %v780, 4
  %v782 = vadd.f32 %v780, %v781
  %v783 = vrot.slane %v782, 2
  %v784 = vadd.f32 %v782, %v783
  %v785 = vrot.slane %v784, 1
  %v786 = vadd.f32 %v784, %v785
  %v787 = vrcp.pop %v786
  %v788 = vmul.f32 %v776, %v787
  %v789 = vmul.f32 %v778, %v787
  %790 = vst [vmem:[%s6] sm:$0xff] %v788
  %791 = vst [vmem:[%s6 + $0x8] sm:$0x1] %v789
  %v792 = vtanh.pop %v761
  %793 = vst [vmem:[%s7 - $0x1] sm:$0x2] %v792
  // Predicated region
  $region26: #{tictactoe_policy_forward.1} parent=0 // pred_check
    _
  $region27: #{tictactoe_policy_forward.1} parent=0 // pred_check_branch
    %795 = sbr.rel (0) target = $region29
  $region28: #{tictactoe_policy_forward.1} parent=0 // pred_region
    _
  $region29: #{tictactoe_policy_forward.1} parent=0 // pred_fallthru
    _
  // Predicated region
  $region30: #{tictactoe_policy_forward.1} parent=0 // pred_check
    _
  $region31: #{tictactoe_policy_forward.1} parent=0 // pred_check_branch
    %797 = sbr.rel (0) target = $region33
  $region32: #{tictactoe_policy_forward.1} parent=0 // pred_region
    _
  $region33: #{tictactoe_policy_forward.1} parent=0 // pred_fallthru
    _
  // Predicated region
  $region34: #{tictactoe_policy_forward.1} parent=0 // pred_check
    _
  $region35: #{tictactoe_policy_forward.1} parent=0 // pred_check_branch
    %799 = sbr.rel (0) target = $region37
  $region36: #{tictactoe_policy_forward.1} parent=0 // pred_region
    _
  $region37: #{tictactoe_policy_forward.1} parent=0 // pred_fallthru
    _
  // Predicated region
  $region38: #{tictactoe_policy_forward.1} parent=0 // pred_check
    _
  $region39: #{tictactoe_policy_forward.1} parent=0 // pred_check_branch
    %801 = sbr.rel (0) target = $region41
  $region40: #{tictactoe_policy_forward.1} parent=0 // pred_region
    _
  $region41: #{tictactoe_policy_forward.1} parent=0 // pred_fallthru
    _

</llo_original>
